<compile_context>
chip_gen: v7x
topology: tpu7x:2x2x1
jax: 0.10.0
libtpu: 0.0.40
codegen_flags: <defaults>
</compile_context>

<pallas_src>
import functools

import jax
import jax.numpy as jnp
from jax.experimental import pallas as pl
from jax.experimental.pallas import tpu as pltpu


def _round_up(x, m):
    return ((x + m - 1) // m) * m


def _vmem_budget_bytes():
    """~75% of per-core VMEM; conservative 64 MiB fallback (v7x per-TC)."""
    try:
        cap = int(pltpu.get_tpu_info().vmem_capacity_bytes)
    except Exception:
        cap = 64 * 1024 * 1024
    return (cap * 3) // 4


def _tile_footprint_bytes(tm, te, k_pad):
    # Double-buffered pipeline buffers allocated by the BlockSpecs:
    # bf16 patch + weight tiles, f32 bias + output tiles.
    return (2 * tm * k_pad * 2        # patch tile
            + 2 * k_pad * te * 2      # weight tile (resident across M axis)
            + 2 * te * 4              # bias tile
            + 2 * tm * te * 4)        # output tile


def _select_tiles(M, k_pad, e_pad, budget):
    """Pick (TM, TE).

    Prefers TE == e_pad (single pass over the patch matrix, the dominant HBM
    stream) and the biggest TM that fits the VMEM budget without excessive M
    padding; guarantees >= 2 grid programs when M allows so both v7x
    TensorCores get work (harmless extra step on single-TC v5e/v6e).
    """
    m_ceil = _round_up(M, 16)                     # bf16 sublane packing

    tm_cands = []
    if m_ceil <= 512:
        tm_cands.append(m_ceil)
    for c in (512, 256, 128, 64, 32, 16, 8):
        if c <= m_ceil and c not in tm_cands:
            tm_cands.append(c)
    # Drop tiles whose M-padding waste exceeds ~12% (keep at least one).
    filtered = [t for t in tm_cands
                if (_round_up(M, t) - M) <= max(M // 8, 32)]
    tm_cands = filtered or tm_cands[-1:]

    # TE candidates: divisors of e_pad that are multiples of 128, descending.
    te_cands = [t for t in range(e_pad, 127, -128) if e_pad % t == 0] or [e_pad]

    tm, te = tm_cands[-1], te_cands[-1]
    found = False
    for te_c in te_cands:                         # largest TE first
        for tm_c in tm_cands:                     # then largest TM that fits
            if _tile_footprint_bytes(tm_c, te_c, k_pad) <= budget:
                tm, te = tm_c, te_c
                found = True
                break
        if found:
            break

    # Megacore occupancy: avoid a (1, 1) grid when M is big enough to split.
    if (e_pad // te) * (_round_up(M, tm) // tm) == 1 and M >= 32:
        tm = min(tm, _round_up((M + 1) // 2, 16))
    return tm, te


# ---------------------------------------------------------------------------
# Pallas kernel: one (TM, TE) output tile of  patches @ W + b
# ---------------------------------------------------------------------------
def _patch_proj_kernel(p_ref, w_ref, b_ref, o_ref):
    # p_ref: (TM, K_pad) bf16   w_ref: (K_pad, TE) bf16 (VMEM-resident over M)
    # b_ref: (1, TE)     f32    o_ref: (TM, TE)    f32
    acc = jnp.dot(p_ref[...], w_ref[...], preferred_element_type=jnp.float32)
    o_ref[...] = (acc + b_ref[...]).astype(o_ref.dtype)


def patch_projection(patches, weight, bias):
    """patches: (M, K) bf16, weight: (K, E) bf16, bias: (E,) -> (M, E) f32."""
    M, K = patches.shape
    E = weight.shape[1]

    k_pad = _round_up(K, 128)                    # full MXU passes, lane-dense
    e_pad = _round_up(E, 128)
    budget = _vmem_budget_bytes()
    tm, te = _select_tiles(M, k_pad, e_pad, budget)
    m_pad = _round_up(M, tm)

    # NOTE: K is kept whole per tile (ViT-scale K fits VMEM easily).  For a
    # huge C*P*P add a trailing "arbitrary" K grid axis + f32 accumulator.
    if (m_pad, k_pad) != (M, K):
        patches = jnp.pad(patches, ((0, m_pad - M), (0, k_pad - K)))
    if (k_pad, e_pad) != (K, E):
        weight = jnp.pad(weight, ((0, k_pad - K), (0, e_pad - E)))
    bias2d = jnp.pad(bias.astype(jnp.float32), (0, e_pad - E)).reshape(1, e_pad)

    # M is the inner (fastest) grid axis so the (K_pad, TE) weight tile's
    # block index is constant across consecutive steps and stays in VMEM.
    grid = (e_pad // te, m_pad // tm)
    n_e = grid[0]

    cost = pl.CostEstimate(
        flops=2 * m_pad * k_pad * e_pad,
        transcendentals=0,
        bytes_accessed=(m_pad * k_pad * 2 * n_e   # patches (re-read per E tile)
                        + k_pad * e_pad * 2       # weight
                        + e_pad * 4               # bias
                        + m_pad * e_pad * 4),     # output
    )

    out = pl.pallas_call(
        _patch_proj_kernel,
        out_shape=jax.ShapeDtypeStruct((m_pad, e_pad), jnp.float32),
        grid_spec=pltpu.PrefetchScalarGridSpec(
            num_scalar_prefetch=0,
            grid=grid,
            in_specs=[
                pl.BlockSpec((tm, k_pad), lambda j, i: (i, 0)),
                pl.BlockSpec((k_pad, te), lambda j, i: (0, j)),
                pl.BlockSpec((1, te), lambda j, i: (0, j)),
            ],
            out_specs=pl.BlockSpec((tm, te), lambda j, i: (i, j)),
        ),
        compiler_params=pltpu.CompilerParams(
            # No cross-grid reduction -> both axes independent; lets megacore
            # shard the grid on v7x, harmless on single-TC parts.
            dimension_semantics=("parallel", "parallel"),
            # Explicit limit so large tiles land on v5e's 16 MiB scoped
            # default; budget is derived from (and below) physical VMEM.
            vmem_limit_bytes=int(budget),
        ),
        cost_estimate=cost,
    )(patches, weight, bias2d)

    if (m_pad, e_pad) != (M, E):
        out = out[:M, :E]
    return out


# ---------------------------------------------------------------------------
# PatchEmbedding forward
# ---------------------------------------------------------------------------
def flatten_conv_weight(conv_weight):
    """nn.Conv2d weight (E, C, P, P) -> (C*P*P, E) bf16.

    Do this ONCE, outside the jitted per-call forward (i.e. store the
    parameter pre-flattened) so no per-call transpose/convert pass is paid.
    """
    E = conv_weight.shape[0]
    return jnp.asarray(conv_weight).reshape(E, -1).T.astype(jnp.bfloat16)


def patch_embedding_forward(x, w_flat, bias, *, patch_size):
    """
    x:      (B, C, H, W)  NCHW, like PyTorch
    w_flat: (C*P*P, E)    bf16, from flatten_conv_weight
    bias:   (E,)
    returns (B, num_patches, E) float32  == Conv2d(stride=P) -> flatten -> T
    """
    B, C, H, W = x.shape
    P = patch_size
    E = w_flat.shape[1]
    gh, gw = H // P, W // P
    num_patches = gh * gw
    M = B * num_patches
    K = C * P * P

    # Cast BEFORE the 6-D transpose: the patch-extraction copy then moves
    # bf16, halving that pass's HBM traffic (mem-bound regime on v6e/v7x).
    xb = x.astype(jnp.bfloat16)
    xp = xb.reshape(B, C, gh, P, gw, P)
    xp = jnp.transpose(xp, (0, 2, 4, 1, 3, 5))          # (B, gh, gw, C, P, P)
    patches = xp.reshape(M, K)                          # flatten order == conv reduction order

    out = patch_projection(patches, w_flat, bias)       # (M, E) f32
    return out.reshape(B, num_patches, E)


if __name__ == "__main__":
    # Small shapes consistent with the module: img_size=16, patch_size=8,
    # in_channels=4, embed_dim=32  ->  num_patches = (16 // 8)^2 = 4
    B, C, H, W = 2, 4, 16, 16
    P, E = 8, 32

    key = jax.random.PRNGKey(0)
    kx, kw, kb = jax.random.split(key, 3)
    x = jax.random.normal(kx, (B, C, H, W), dtype=jnp.float32)
    conv_weight = jax.random.normal(kw, (E, C, P, P), dtype=jnp.float32) * 0.02
    conv_bias = jax.random.normal(kb, (E,), dtype=jnp.float32) * 0.02

    # Weight flattened / cast once, outside the jitted forward.
    w_flat = flatten_conv_weight(conv_weight)

    fwd = jax.jit(functools.partial(patch_embedding_forward, patch_size=P))
    out = jax.block_until_ready(fwd(x, w_flat, conv_bias))

    # Reference: f32 strided conv (exact PyTorch semantics), then flatten + T.
    ref = jax.lax.conv_general_dilated(
        x, conv_weight, window_strides=(P, P), padding="VALID",
        dimension_numbers=("NCHW", "OIHW", "NCHW"),
    ) + conv_bias.reshape(1, E, 1, 1)
    ref = jnp.transpose(ref.reshape(B, E, -1), (0, 2, 1))

    assert out.shape == (B, (H // P) * (W // P), E)
    # bf16 operands with f32 MXU accumulation -> loosened tolerance vs f32 ref.
    assert jnp.allclose(out, ref, atol=2e-2, rtol=2e-2), (
        float(jnp.max(jnp.abs(out - ref))))

    print("KERNEL_OK")
</pallas_src>

<mosaic_0001>
module attributes {stable_mosaic.version = 11 : i64} {
  func.func @_patch_proj_kernel(%arg0: i32, %arg1: i32, %arg2: memref<16x256xbf16, #tpu.memory_space<vmem>>, %arg3: memref<256x128xbf16, #tpu.memory_space<vmem>>, %arg4: memref<1x128xf32, #tpu.memory_space<vmem>>, %arg5: memref<16x128xf32, #tpu.memory_space<vmem>>) attributes {dimension_semantics = [#tpu.dimension_semantics<parallel>, #tpu.dimension_semantics<parallel>], iteration_bounds = array<i64: 1, 1>, scalar_prefetch = 0 : i64, scratch_operands = 0 : i64, tpu.core_type = #tpu.core_type<tc>, window_params = [{transform_indices = @transform_0, window_bounds = array<i64: 16, 256>}, {transform_indices = @transform_1, window_bounds = array<i64: 256, 128>}, {transform_indices = @transform_2, window_bounds = array<i64: 1, 128>}, {transform_indices = @transform_3, window_bounds = array<i64: 16, 128>}]} {
    %c0 = arith.constant 0 : index
    %c0_0 = arith.constant 0 : index
    %0 = vector.load %arg2[%c0, %c0_0] : memref<16x256xbf16, #tpu.memory_space<vmem>>, vector<16x256xbf16>
    %c0_1 = arith.constant 0 : index
    %c0_2 = arith.constant 0 : index
    %1 = vector.load %arg3[%c0_1, %c0_2] : memref<256x128xbf16, #tpu.memory_space<vmem>>, vector<256x128xbf16>
    %cst = arith.constant dense<0.000000e+00> : vector<16x128xf32>
    %2 = tpu.matmul %0, %1, %cst {dimension_numbers = #tpu.dot_dimension_numbers<[1], [0], [0], [1], [0, 0, 1, 1], [], []>} : vector<16x256xbf16>, vector<256x128xbf16>, vector<16x128xf32> -> vector<16x128xf32>
    %c0_3 = arith.constant 0 : index
    %c0_4 = arith.constant 0 : index
    %3 = vector.load %arg4[%c0_3, %c0_4] : memref<1x128xf32, #tpu.memory_space<vmem>>, vector<1x128xf32>
    %4 = vector.broadcast %3 : vector<1x128xf32> to vector<16x128xf32>
    %5 = arith.addf %2, %4 : vector<16x128xf32>
    %c0_5 = arith.constant 0 : index
    %c0_6 = arith.constant 0 : index
    %6 = vector.load %arg5[%c0_5, %c0_6] : memref<16x128xf32, #tpu.memory_space<vmem>>, vector<16x128xf32>
    tpu.vector_store %arg5[%c0_5, %c0_6], %5 {strides = array<i32>} : memref<16x128xf32, #tpu.memory_space<vmem>>, vector<16x128xf32>,
    return
  }
  func.func @transform_0(%arg0: i32, %arg1: i32) -> (i32, i32) {
    %c0_i32 = arith.constant 0 : i32
    %c0_i32_0 = arith.constant 0 : i32
    return %arg1, %c0_i32 : i32, i32
  }
  func.func @transform_1(%arg0: i32, %arg1: i32) -> (i32, i32) {
    %c0_i32 = arith.constant 0 : i32
    %c0_i32_0 = arith.constant 0 : i32
    return %c0_i32, %arg0 : i32, i32
  }
  func.func @transform_2(%arg0: i32, %arg1: i32) -> (i32, i32) {
    %c0_i32 = arith.constant 0 : i32
    %c0_i32_0 = arith.constant 0 : i32
    return %c0_i32, %arg0 : i32, i32
  }
  func.func @transform_3(%arg0: i32, %arg1: i32) -> (i32, i32) {
    %c0_i32 = arith.constant 0 : i32
    return %arg1, %arg0 : i32, i32
  }
}

</mosaic_0001>

<llo_original>
// kernel: patch_embedding_forward.1
$region0: #{patch_embedding_forward.1}
  #allocation0 [shape = 'u32[]', space=smem, size = 0x4, offset = 0x4, fixed_abs, tag = 'smem constant byte address 0x4 - core index']
  #allocation1 [shape = 'u32[144,128]{1,0:T(1,128)}', space=vmem, size = 0x12000, scoped, tag = 'internal scratch']
  %s0 = inlined_call_operand.vmem [shape: bf16[16,256], index: 0, kind: input, shape index: {}]
  %s1 = inlined_call_operand.vmem [shape: bf16[256,128], index: 1, kind: input, shape index: {}]
  %s2 = inlined_call_operand.vmem [shape: f32[1,128], index: 2, kind: input, shape index: {}]
  %s3 = inlined_call_operand.vmem [shape: f32[16,128], index: 3, kind: output, shape index: {}]
  %s4 = sld [smem:[#allocation0]]
  $region22: #{patch_embedding_forward.1} parent=0
    _
  %s6 = ssub.s32 1, %s4
  %s7 = scalar_select 0, %s6, %s4
  // Predicated region
  $region2: #{patch_embedding_forward.1} parent=0 // pred_check
    _
  $region3: #{patch_embedding_forward.1} parent=0 // pred_check_branch
    %9 = sbr.rel (0) target = $region5
  $region4: #{patch_embedding_forward.1} parent=0 // pred_region
    _
  $region5: #{patch_embedding_forward.1} parent=0 // pred_fallthru
    _
  // Predicated region
  $region6: #{patch_embedding_forward.1} parent=0 // pred_check
    _
  $region7: #{patch_embedding_forward.1} parent=0 // pred_check_branch
    %11 = sbr.rel (0) target = $region9
  $region8: #{patch_embedding_forward.1} parent=0 // pred_region
    _
  $region9: #{patch_embedding_forward.1} parent=0 // pred_fallthru
    _
  // Predicated region
  $region10: #{patch_embedding_forward.1} parent=0 // pred_check
    _
  $region11: #{patch_embedding_forward.1} parent=0 // pred_check_branch
    %13 = sbr.rel (0) target = $region13
  $region12: #{patch_embedding_forward.1} parent=0 // pred_region
    _
  $region13: #{patch_embedding_forward.1} parent=0 // pred_fallthru
    _
  %v15 = vld [vmem:[%s0] sm:$0xff]
  %v16 = vld [vmem:[%s0 + $0x8] sm:$0xff]
  %v17 = vld [vmem:[%s1] sm:$0xf]
  %v18 = vld [vmem:[%s1 + $0x4] sm:$0xf]
  %v19 = vld [vmem:[%s1 + $0x8] sm:$0xf]
  %v20 = vld [vmem:[%s1 + $0xc] sm:$0xf]
  %v21 = vld [vmem:[%s1 + $0x10] sm:$0xf]
  %v22 = vld [vmem:[%s1 + $0x14] sm:$0xf]
  %v23 = vld [vmem:[%s1 + $0x18] sm:$0xf]
  %v24 = vld [vmem:[%s1 + $0x1c] sm:$0xf]
  %v25 = vld [vmem:[%s1 + $0x20] sm:$0xf]
  %v26 = vld [vmem:[%s1 + $0x24] sm:$0xf]
  %v27 = vld [vmem:[%s1 + $0x28] sm:$0xf]
  %v28 = vld [vmem:[%s1 + $0x2c] sm:$0xf]
  %v29 = vld [vmem:[%s1 + $0x30] sm:$0xf]
  %v30 = vld [vmem:[%s1 + $0x34] sm:$0xf]
  %v31 = vld [vmem:[%s1 + $0x38] sm:$0xf]
  %v32 = vld [vmem:[%s1 + $0x3c] sm:$0xf]
  %v33 = vld [vmem:[%s1 + $0x40] sm:$0xf]
  %v34 = vld [vmem:[%s1 + $0x44] sm:$0xf]
  %v35 = vld [vmem:[%s1 + $0x48] sm:$0xf]
  %v36 = vld [vmem:[%s1 + $0x4c] sm:$0xf]
  %v37 = vld [vmem:[%s1 + $0x50] sm:$0xf]
  %v38 = vld [vmem:[%s1 + $0x54] sm:$0xf]
  %v39 = vld [vmem:[%s1 + $0x58] sm:$0xf]
  %v40 = vld [vmem:[%s1 + $0x5c] sm:$0xf]
  %v41 = vld [vmem:[%s1 + $0x60] sm:$0xf]
  %v42 = vld [vmem:[%s1 + $0x64] sm:$0xf]
  %v43 = vld [vmem:[%s1 + $0x68] sm:$0xf]
  %v44 = vld [vmem:[%s1 + $0x6c] sm:$0xf]
  %v45 = vld [vmem:[%s1 + $0x70] sm:$0xf]
  %v46 = vld [vmem:[%s1 + $0x74] sm:$0xf]
  %v47 = vld [vmem:[%s1 + $0x78] sm:$0xf]
  %v48 = vld [vmem:[%s1 + $0x7c] sm:$0xf]
  %v49 = vld [vmem:[%s2] sm:$0x1]
  %v51 = vlaneseq
  %v52 = vshrl.u32 %v51, 7
  %v53 = vsub.s32 0, %v52
  %v54 = vrot.slane %v49, %v53
  %v58 = vunpack.c.l.b16 %v15
  %v59 = vunpack.c.h.b16 %v15
  %v60 = vunpack.c.l.b16 %v16
  %v61 = vunpack.c.h.b16 %v16
  %v62 = vpack.c.b16 %v60, %v58
  %v63 = vpack.c.b16 %v61, %v59
  %v98 = vunpack.c.l.b16 %v17
  %v99 = vunpack.c.l.b16 %v18
  %v100 = vunpack.c.l.b16 %v19
  %v101 = vunpack.c.l.b16 %v20
  %v102 = vunpack.c.l.b16 %v21
  %v103 = vunpack.c.l.b16 %v22
  %v104 = vunpack.c.l.b16 %v23
  %v105 = vunpack.c.l.b16 %v24
  %v106 = vunpack.c.l.b16 %v25
  %v107 = vunpack.c.l.b16 %v26
  %v108 = vunpack.c.l.b16 %v27
  %v109 = vunpack.c.l.b16 %v28
  %v110 = vunpack.c.l.b16 %v29
  %v111 = vunpack.c.l.b16 %v30
  %v112 = vunpack.c.l.b16 %v31
  %v113 = vunpack.c.l.b16 %v32
  %v114 = vunpack.c.l.b16 %v33
  %v115 = vunpack.c.l.b16 %v34
  %v116 = vunpack.c.l.b16 %v35
  %v117 = vunpack.c.l.b16 %v36
  %v118 = vunpack.c.l.b16 %v37
  %v119 = vunpack.c.l.b16 %v38
  %v120 = vunpack.c.l.b16 %v39
  %v121 = vunpack.c.l.b16 %v40
  %v122 = vunpack.c.l.b16 %v41
  %v123 = vunpack.c.l.b16 %v42
  %v124 = vunpack.c.l.b16 %v43
  %v125 = vunpack.c.l.b16 %v44
  %v126 = vunpack.c.l.b16 %v45
  %v127 = vunpack.c.l.b16 %v46
  %v128 = vunpack.c.l.b16 %v47
  %v129 = vunpack.c.l.b16 %v48
  %v130 = vpack.c.b16 %v99, %v98
  %v131 = vpack.c.b16 %v101, %v100
  %v132 = vpack.c.b16 %v103, %v102
  %v133 = vpack.c.b16 %v105, %v104
  %v134 = vpack.c.b16 %v107, %v106
  %v135 = vpack.c.b16 %v109, %v108
  %v136 = vpack.c.b16 %v111, %v110
  %v137 = vpack.c.b16 %v113, %v112
  %v138 = vpack.c.b16 %v115, %v114
  %v139 = vpack.c.b16 %v117, %v116
  %v140 = vpack.c.b16 %v119, %v118
  %v141 = vpack.c.b16 %v121, %v120
  %v142 = vpack.c.b16 %v123, %v122
  %v143 = vpack.c.b16 %v125, %v124
  %v144 = vpack.c.b16 %v127, %v126
  %v145 = vpack.c.b16 %v129, %v128
  %162 = vmatprep.subr.bf16.mxu0 0
  %163 = vmatpush1.bf16.msra.mxu0 %v130
  %164 = vmatprep.subr.bf16.mxu0 0
  %165 = vmatpush1.bf16.msra.mxu0 %v131
  %166 = vmatprep.subr.bf16.mxu0 0
  %167 = vmatpush1.bf16.msra.mxu0 %v132
  %168 = vmatprep.subr.bf16.mxu0 0
  %169 = vmatpush1.bf16.msra.mxu0 %v133
  %170 = vmatprep.subr.bf16.mxu0 0
  %171 = vmatpush1.bf16.msra.mxu0 %v134
  %172 = vmatprep.subr.bf16.mxu0 0
  %173 = vmatpush1.bf16.msra.mxu0 %v135
  %174 = vmatprep.subr.bf16.mxu0 0
  %175 = vmatpush1.bf16.msra.mxu0 %v136
  %176 = vmatprep.subr.bf16.mxu0 0
  %177 = vmatpush1.bf16.msra.mxu0 %v137
  %178 = vmatprep.subr.bf16.mxu0 0
  %179 = vmatpush1.bf16.msra.mxu0 %v138
  %180 = vmatprep.subr.bf16.mxu0 0
  %181 = vmatpush1.bf16.msra.mxu0 %v139
  %182 = vmatprep.subr.bf16.mxu0 0
  %183 = vmatpush1.bf16.msra.mxu0 %v140
  %184 = vmatprep.subr.bf16.mxu0 0
  %185 = vmatpush1.bf16.msra.mxu0 %v141
  %186 = vmatprep.subr.bf16.mxu0 0
  %187 = vmatpush1.bf16.msra.mxu0 %v142
  %188 = vmatprep.subr.bf16.mxu0 0
  %189 = vmatpush1.bf16.msra.mxu0 %v143
  %190 = vmatprep.subr.bf16.mxu0 0
  %191 = vmatpush1.bf16.msra.mxu0 %v144
  %192 = vmatprep.subr.bf16.mxu0 0
  %193 = vmatpush1.bf16.msra.mxu0 %v145
  %194 = vmatprep.mubr.bf16.mxu0 %v63
  %195 = vmatmul.mubr.bf16.gmra.mrb[0].mxu0 %v62
  %v196 = vpop.f32.mrb[0].mxu0
  %v197 = vadd.f32 %v54, %v196
  %v198 = vpop.f32.mrb[0].mxu0
  %v199 = vpop.f32.mrb[0].mxu0
  %v200 = vadd.f32 %v54, %v199
  %v201 = vpop.f32.mrb[0].mxu0
  %202 = vdwg.mxu0
  %203 = vst [vmem:[%s3] sm:$0xff] %v197
  %204 = vst [vmem:[%s3 + $0x8] sm:$0xff] %v200
  // Predicated region
  $region14: #{patch_embedding_forward.1} parent=0 // pred_check
    _
  $region15: #{patch_embedding_forward.1} parent=0 // pred_check_branch
    %206 = sbr.rel (0) target = $region17
  $region16: #{patch_embedding_forward.1} parent=0 // pred_region
    _
  $region17: #{patch_embedding_forward.1} parent=0 // pred_fallthru
    _
  // Predicated region
  $region18: #{patch_embedding_forward.1} parent=0 // pred_check
    _
  $region19: #{patch_embedding_forward.1} parent=0 // pred_check_branch
    %208 = sbr.rel (0) target = $region21
  $region20: #{patch_embedding_forward.1} parent=0 // pred_region
    _
  $region21: #{patch_embedding_forward.1} parent=0 // pred_fallthru
    _

</llo_original>
